<compile_context>
chip_gen: v5e
topology: v5e:2x2
jax: 0.10.0
libtpu: 0.0.40
codegen_flags: <defaults>
</compile_context>

<pallas_src>
import functools

import jax
import jax.numpy as jnp
from jax.experimental import pallas as pl
from jax.experimental.pallas import tpu as pltpu


# --------------------- packed small-parameter layout ----------------------- #
# One row per parameter, each row padded to 512 lanes (lane offset 0 for every
# slice -> no lane shifts; single-sublane slices of one resident array).
_P_ROWS = 16
_P_LANES = 512
_PACK_LAYOUT = (
    ("b11", 0, 512), ("g11", 1, 512), ("be11", 2, 512),
    ("b12", 3, 256), ("g12", 4, 256), ("be12", 5, 256),
    ("b21", 6, 128), ("g21", 7, 128), ("be21", 8, 128),
    ("b22", 9, 64), ("g22", 10, 64), ("be22", 11, 64),
    ("w3x", 12, 256), ("w3y", 13, 64), ("b3", 14, 1),
)
_ROW = {name: (r, n) for name, r, n in _PACK_LAYOUT}


def _round_up(x, m):
    return ((x + m - 1) // m) * m


def _pack_small_params(params):
    packed = jnp.zeros((_P_ROWS, _P_LANES), jnp.float32)
    for name, r, n in _PACK_LAYOUT:
        v = jnp.reshape(params[name], (-1,)).astype(jnp.float32)
        packed = packed.at[r].set(jnp.pad(v, (0, _P_LANES - n)))
    return packed


def _device_defaults():
    """Per-chip defaults: (elementwise_dtype, tile_b, min_grid_steps)."""
    kind = ""
    try:
        kind = jax.devices()[0].device_kind.lower()
    except Exception:  # pragma: no cover - defensive only
        pass
    is_v5e = any(t in kind for t in ("v5e", "v5 lite", "v5litepod"))
    is_v7 = "v7" in kind
    ew_dtype = jnp.float32 if is_v5e else jnp.bfloat16   # no bf16 VPU/EUP on v5e
    if is_v7:
        tile_b, min_grid = 1024, 2      # keep both TensorCores busy
    elif is_v5e:
        tile_b, min_grid = 1024, 1      # 16 MiB default scoped VMEM
    else:
        tile_b, min_grid = 2048, 1      # v6e: single TC, amortize step overhead
    return ew_dtype, tile_b, min_grid


# ----------------------------- Pallas kernel ------------------------------- #
def _critic_kernel(state_ref, action_ref,
                   w11_ref, w12_ref, w21_ref, w22_ref,
                   p_ref, q_ref, *, compute_dtype, elementwise_dtype):
    ew = elementwise_dtype

    def prm(name, dtype=jnp.float32):
        r, n = _ROW[name]
        return p_ref[r:r + 1, 0:n].astype(dtype)      # (1, n), broadcasts over batch

    def elu(x):
        # F.elu(alpha=1). min(x,0) keeps the unselected exp branch finite; the
        # exp(.)-1 form avoids relying on an expm1 lowering.
        zero = jnp.zeros_like(x)
        return jnp.where(x > 0, x, jnp.exp(jnp.minimum(x, zero)) - 1.0)

    def ln_elu(x_f32, gname, bname, n):
        # One-pass LN statistics in f32 (the two cross-lane reductions can
        # overlap on the XLU), then the affine + ELU chain in `ew`
        # (bf16 on v6e/v7x -> 2x VPU/EUP throughput; f32 on v5e).
        inv_n = jnp.float32(1.0 / n)
        s1 = jnp.sum(x_f32, axis=-1, keepdims=True)
        s2 = jnp.sum(x_f32 * x_f32, axis=-1, keepdims=True)
        mean = s1 * inv_n
        var = jnp.maximum(s2 * inv_n - mean * mean, 0.0)
        inv = jax.lax.rsqrt(var + 1e-5)
        xh = (x_f32.astype(ew) - mean.astype(ew)) * inv.astype(ew)
        h = xh * prm(gname, ew) + prm(bname, ew)
        return elu(h)

    s = state_ref[...].astype(compute_dtype)
    a = action_ref[...].astype(compute_dtype)

    # state branch: fc11 -> LN(512) -> ELU -> fc12 -> LN(256) -> ELU
    x = jnp.dot(s, w11_ref[...], preferred_element_type=jnp.float32) + prm("b11")
    x = ln_elu(x, "g11", "be11", 512)
    x = jnp.dot(x.astype(compute_dtype), w12_ref[...],
                preferred_element_type=jnp.float32) + prm("b12")
    x = ln_elu(x, "g12", "be12", 256)

    # action branch: fc21 -> LN(128) -> ELU -> fc22 -> LN(64) -> ELU
    y = jnp.dot(a, w21_ref[...], preferred_element_type=jnp.float32) + prm("b21")
    y = ln_elu(y, "g21", "be21", 128)
    y = jnp.dot(y.astype(compute_dtype), w22_ref[...],
                preferred_element_type=jnp.float32) + prm("b22")
    y = ln_elu(y, "g22", "be22", 64)

    # fc3 on concat([x, y], dim=1), N=1 output: VPU multiply + lane reduction
    # (equivalent to x @ W3[:256] + y @ W3[256:] + b3, kept off the MXU).
    q = (jnp.sum(x.astype(jnp.float32) * prm("w3x"), axis=-1, keepdims=True)
         + jnp.sum(y.astype(jnp.float32) * prm("w3y"), axis=-1, keepdims=True)
         + prm("b3"))
    q_ref[...] = q.astype(q_ref.dtype)


# -------------------------------- wrapper ----------------------------------- #
def critic_forward(state, action, params, *, tile_b=None,
                   compute_dtype=jnp.bfloat16, elementwise_dtype=None,
                   min_grid_steps=None):
    """Q(state, action) -> [B, 1] float32."""
    B, in_dim = state.shape
    n_act = action.shape[1]

    dflt_ew, dflt_tile, dflt_min_grid = _device_defaults()
    if elementwise_dtype is None:
        elementwise_dtype = dflt_ew
    if tile_b is None:
        tile_b = dflt_tile
    if min_grid_steps is None:
        min_grid_steps = dflt_min_grid

    # Batch tiling: tile_b multiple of 8, at least `min_grid_steps` grid steps
    # whenever the batch allows (v7x: shard the parallel axis over both TCs).
    B8 = _round_up(B, 8)
    tile_b = max(8, min(tile_b, _round_up(pl.cdiv(B8, min_grid_steps), 8)))
    Bp = _round_up(B8, tile_b)
    if Bp != B:
        state = jnp.pad(state, ((0, Bp - B), (0, 0)))
        action = jnp.pad(action, ((0, Bp - B), (0, 0)))
    grid = (Bp // tile_b,)

    # Weights cast once outside the kernel -> half the weight DMA bytes in bf16.
    w11 = params["w11"].astype(compute_dtype)
    w12 = params["w12"].astype(compute_dtype)
    w21 = params["w21"].astype(compute_dtype)
    w22 = params["w22"].astype(compute_dtype)
    packed = _pack_small_params(params)

    # Advisory cost model: this call is elementwise/latency-bound.
    w_elems = in_dim * 512 + 512 * 256 + n_act * 128 + 128 * 64
    cost = pl.CostEstimate(
        flops=int(2 * Bp * (w_elems + 256 + 64)),
        transcendentals=int(Bp * (512 + 256 + 128 + 64 + 4)),
        bytes_accessed=int(w_elems * jnp.dtype(compute_dtype).itemsize
                           + _P_ROWS * _P_LANES * 4
                           + Bp * (in_dim + n_act + 1) * 4),
    )

    batch_spec = lambda feat: pl.BlockSpec((tile_b, feat), lambda i: (i, 0))
    resident = lambda shape: pl.BlockSpec(shape, lambda i: (0, 0))

    q = pl.pallas_call(
        functools.partial(_critic_kernel, compute_dtype=compute_dtype,
                          elementwise_dtype=elementwise_dtype),
        out_shape=jax.ShapeDtypeStruct((Bp, 1), jnp.float32),
        grid=grid,
        in_specs=[
            batch_spec(in_dim),             # state
            batch_spec(n_act),              # action
            resident(w11.shape),            # fc11 weight (resident in VMEM)
            resident(w12.shape),            # fc12 weight
            resident(w21.shape),            # fc21 weight
            resident(w22.shape),            # fc22 weight
            resident((_P_ROWS, _P_LANES)),  # packed biases / LN params / fc3
        ],
        out_specs=batch_spec(1),
        compiler_params=pltpu.CompilerParams(
            dimension_semantics=("parallel",),
            vmem_limit_bytes=(64 * 1024 * 1024 if tile_b >= 2048 else None)),
        cost_estimate=cost,
    )(state, action, w11, w12, w21, w22, packed)

    return q[:B]


# ---------------------- deterministic parameter init ----------------------- #
def make_params(key, input_dim, n_actions):
    def uniform_linear(key, fan_in, fan_out, sc):
        kw, kb = jax.random.split(key)
        # PyTorch weight is [out, in]; we store transposed [in, out].
        w = jax.random.uniform(kw, (fan_in, fan_out), jnp.float32, -sc, sc)
        b = jax.random.uniform(kb, (fan_out,), jnp.float32, -sc, sc)
        return w, b

    keys = jax.random.split(key, 5)
    # init_layer: sc = 1/sqrt(weight.size()[0]) = 1/sqrt(out_features)
    w11, b11 = uniform_linear(keys[0], input_dim, 512, 512.0 ** -0.5)
    w12, b12 = uniform_linear(keys[1], 512, 256, 256.0 ** -0.5)
    w21, b21 = uniform_linear(keys[2], n_actions, 128, 128.0 ** -0.5)
    # fc22 is NOT passed to init_layer in the original module -> PyTorch
    # default Linear init, bound 1/sqrt(fan_in) = 1/sqrt(128).
    w22, b22 = uniform_linear(keys[3], 128, 64, 128.0 ** -0.5)
    w3, b3 = uniform_linear(keys[4], 256 + 64, 1, 0.003)

    return dict(
        w11=w11, b11=b11, g11=jnp.ones((512,), jnp.float32), be11=jnp.zeros((512,), jnp.float32),
        w12=w12, b12=b12, g12=jnp.ones((256,), jnp.float32), be12=jnp.zeros((256,), jnp.float32),
        w21=w21, b21=b21, g21=jnp.ones((128,), jnp.float32), be21=jnp.zeros((128,), jnp.float32),
        w22=w22, b22=b22, g22=jnp.ones((64,), jnp.float32), be22=jnp.zeros((64,), jnp.float32),
        w3x=w3[:256, 0], w3y=w3[256:, 0], b3=b3,
    )


# --------------------------- plain-JAX reference ---------------------------- #
def reference_forward(state, action, p):
    def elu(x):
        return jnp.where(x > 0, x, jnp.expm1(jnp.minimum(x, 0.0)))

    def ln(x, g, b, eps=1e-5):
        m = jnp.mean(x, axis=-1, keepdims=True)
        v = jnp.mean((x - m) ** 2, axis=-1, keepdims=True)
        return (x - m) / jnp.sqrt(v + eps) * g + b

    x = elu(ln(state @ p["w11"] + p["b11"], p["g11"], p["be11"]))
    x = elu(ln(x @ p["w12"] + p["b12"], p["g12"], p["be12"]))
    y = elu(ln(action @ p["w21"] + p["b21"], p["g21"], p["be21"]))
    y = elu(ln(y @ p["w22"] + p["b22"], p["g22"], p["be22"]))
    z = jnp.concatenate([x, y], axis=1)
    w3 = jnp.concatenate([p["w3x"], p["w3y"]], axis=0)[:, None]
    return z @ w3 + p["b3"]


# TODO(synk): the Adam optimizer and checkpoint save/load of the PyTorch module
# are training/IO machinery with no Pallas equivalent; only forward() is ported.

if __name__ == "__main__":
    INPUT_DIM = 32     # *input_dims of the state vector
    N_ACTIONS = 8
    BATCH = 8

    root = jax.random.PRNGKey(0)
    k_params, k_state, k_action = jax.random.split(root, 3)

    params = make_params(k_params, INPUT_DIM, N_ACTIONS)
    state = jax.random.normal(k_state, (BATCH, INPUT_DIM), jnp.float32)
    action = jax.random.normal(k_action, (BATCH, N_ACTIONS), jnp.float32)

    q_ref = reference_forward(state, action, params)

    # 1) f32 MXU + f32 elementwise path. (Tolerance covers the TPU default-
    #    precision matmul of the plain-JAX reference and the one-pass LN.)
    fwd_f32 = jax.jit(functools.partial(critic_forward,
                                        compute_dtype=jnp.float32,
                                        elementwise_dtype=jnp.float32,
                                        min_grid_steps=1))
    q_f32 = jax.block_until_ready(fwd_f32(state, action, params))
    assert q_f32.shape == (BATCH, 1)
    assert bool(jnp.all(jnp.isfinite(q_f32)))
    assert jnp.allclose(q_f32, q_ref, atol=2e-2, rtol=2e-2), (q_f32, q_ref)

    # 2) default perf config (bf16 MXU operands; bf16 elementwise on v6e/v7x,
    #    f32 on v5e): looser tolerance.
    fwd_perf = jax.jit(critic_forward)
    q_perf = jax.block_until_ready(fwd_perf(state, action, params))
    assert q_perf.shape == (BATCH, 1)
    assert bool(jnp.all(jnp.isfinite(q_perf)))
    assert jnp.allclose(q_perf, q_ref, atol=5e-2, rtol=5e-2), (q_perf, q_ref)

    # 3) multi-step batch grid + padding path (B not a multiple of the tile).
    B2 = 20
    state2 = jax.random.normal(jax.random.PRNGKey(1), (B2, INPUT_DIM), jnp.float32)
    action2 = jax.random.normal(jax.random.PRNGKey(2), (B2, N_ACTIONS), jnp.float32)
    fwd_grid = jax.jit(functools.partial(critic_forward,
                                         compute_dtype=jnp.float32,
                                         elementwise_dtype=jnp.float32,
                                         tile_b=8, min_grid_steps=1))
    q_grid = jax.block_until_ready(fwd_grid(state2, action2, params))
    q_grid_ref = reference_forward(state2, action2, params)
    assert q_grid.shape == (B2, 1)
    assert jnp.allclose(q_grid, q_grid_ref, atol=2e-2, rtol=2e-2), (q_grid, q_grid_ref)

    print("KERNEL_OK")
</pallas_src>

<mosaic_0001>
module attributes {stable_mosaic.version = 11 : i64} {
  func.func @_critic_kernel(%arg0: i32, %arg1: memref<8x32xf32, #tpu.memory_space<vmem>>, %arg2: memref<8x8xf32, #tpu.memory_space<vmem>>, %arg3: memref<32x512xf32, #tpu.memory_space<vmem>>, %arg4: memref<512x256xf32, #tpu.memory_space<vmem>>, %arg5: memref<8x128xf32, #tpu.memory_space<vmem>>, %arg6: memref<128x64xf32, #tpu.memory_space<vmem>>, %arg7: memref<16x512xf32, #tpu.memory_space<vmem>>, %arg8: memref<8x1xf32, #tpu.memory_space<vmem>>) attributes {dimension_semantics = [#tpu.dimension_semantics<parallel>], iteration_bounds = array<i64: 1>, scalar_prefetch = 0 : i64, scratch_operands = 0 : i64, tpu.core_type = #tpu.core_type<tc>, window_params = [{transform_indices = @transform_0, window_bounds = array<i64: 8, 32>}, {transform_indices = @transform_1, window_bounds = array<i64: 8, 8>}, {pipeline_mode = #tpu.pipeline_mode<synchronous>, transform_indices = @transform_2, window_bounds = array<i64: 32, 512>}, {pipeline_mode = #tpu.pipeline_mode<synchronous>, transform_indices = @transform_3, window_bounds = array<i64: 512, 256>}, {pipeline_mode = #tpu.pipeline_mode<synchronous>, transform_indices = @transform_4, window_bounds = array<i64: 8, 128>}, {pipeline_mode = #tpu.pipeline_mode<synchronous>, transform_indices = @transform_5, window_bounds = array<i64: 128, 64>}, {pipeline_mode = #tpu.pipeline_mode<synchronous>, transform_indices = @transform_6, window_bounds = array<i64: 16, 512>}, {transform_indices = @transform_7, window_bounds = array<i64: 8, 1>}]} {
    %c0 = arith.constant 0 : index
    %c0_0 = arith.constant 0 : index
    %0 = vector.load %arg1[%c0, %c0_0] : memref<8x32xf32, #tpu.memory_space<vmem>>, vector<8x32xf32>
    %c0_1 = arith.constant 0 : index
    %c0_2 = arith.constant 0 : index
    %1 = vector.load %arg2[%c0_1, %c0_2] : memref<8x8xf32, #tpu.memory_space<vmem>>, vector<8x8xf32>
    %c0_3 = arith.constant 0 : index
    %c0_4 = arith.constant 0 : index
    %2 = vector.load %arg3[%c0_3, %c0_4] : memref<32x512xf32, #tpu.memory_space<vmem>>, vector<32x512xf32>
    %cst = arith.constant dense<0.000000e+00> : vector<8x512xf32>
    %3 = tpu.matmul %0, %2, %cst {dimension_numbers = #tpu.dot_dimension_numbers<[1], [0], [0], [1], [0, 0, 1, 1], [], []>} : vector<8x32xf32>, vector<32x512xf32>, vector<8x512xf32> -> vector<8x512xf32>
    %c0_5 = arith.constant 0 : index
    %c0_6 = arith.constant 0 : index
    %4 = vector.load %arg7[%c0_5, %c0_6] : memref<16x512xf32, #tpu.memory_space<vmem>>, vector<1x512xf32>
    %5 = vector.broadcast %4 : vector<1x512xf32> to vector<8x512xf32>
    %6 = arith.addf %3, %5 : vector<8x512xf32>
    %cst_7 = arith.constant dense<0.000000e+00> : vector<8xf32>
    %7 = vector.multi_reduction <add>, %6, %cst_7 [1] : vector<8x512xf32> to vector<8xf32>
    %8 = vector.shape_cast %7 : vector<8xf32> to vector<8x1xf32>
    %9 = arith.mulf %6, %6 : vector<8x512xf32>
    %cst_8 = arith.constant dense<0.000000e+00> : vector<8xf32>
    %10 = vector.multi_reduction <add>, %9, %cst_8 [1] : vector<8x512xf32> to vector<8xf32>
    %11 = vector.shape_cast %10 : vector<8xf32> to vector<8x1xf32>
    %cst_9 = arith.constant 0.001953125 : f32
    %12 = vector.broadcast %cst_9 : f32 to vector<8x1xf32>
    %13 = arith.mulf %8, %12 : vector<8x1xf32>
    %cst_10 = arith.constant 0.001953125 : f32
    %14 = vector.broadcast %cst_10 : f32 to vector<8x1xf32>
    %15 = arith.mulf %11, %14 : vector<8x1xf32>
    %16 = arith.mulf %13, %13 : vector<8x1xf32>
    %17 = arith.subf %15, %16 : vector<8x1xf32>
    %cst_11 = arith.constant 0.000000e+00 : f32
    %18 = vector.broadcast %cst_11 : f32 to vector<8x1xf32>
    %19 = arith.maximumf %17, %18 : vector<8x1xf32>
    %cst_12 = arith.constant 9.99999974E-6 : f32
    %20 = vector.broadcast %cst_12 : f32 to vector<8x1xf32>
    %21 = arith.addf %19, %20 : vector<8x1xf32>
    %22 = math.rsqrt %21 : vector<8x1xf32>
    %23 = vector.broadcast %13 : vector<8x1xf32> to vector<8x512xf32>
    %24 = arith.subf %6, %23 : vector<8x512xf32>
    %25 = vector.broadcast %22 : vector<8x1xf32> to vector<8x512xf32>
    %26 = arith.mulf %24, %25 : vector<8x512xf32>
    %c1 = arith.constant 1 : index
    %c0_13 = arith.constant 0 : index
    %27 = vector.load %arg7[%c1, %c0_13] : memref<16x512xf32, #tpu.memory_space<vmem>>, vector<1x512xf32>
    %28 = vector.broadcast %27 : vector<1x512xf32> to vector<8x512xf32>
    %29 = arith.mulf %26, %28 : vector<8x512xf32>
    %c2 = arith.constant 2 : index
    %c0_14 = arith.constant 0 : index
    %30 = vector.load %arg7[%c2, %c0_14] : memref<16x512xf32, #tpu.memory_space<vmem>>, vector<1x512xf32>
    %31 = vector.broadcast %30 : vector<1x512xf32> to vector<8x512xf32>
    %32 = arith.addf %29, %31 : vector<8x512xf32>
    %cst_15 = arith.constant 0.000000e+00 : f32
    %33 = vector.broadcast %cst_15 : f32 to vector<8x512xf32>
    %cst_16 = arith.constant 0.000000e+00 : f32
    %34 = vector.broadcast %cst_16 : f32 to vector<8x512xf32>
    %35 = arith.cmpf ogt, %32, %34 : vector<8x512xf32>
    %36 = arith.minimumf %32, %33 : vector<8x512xf32>
    %37 = math.exp %36 : vector<8x512xf32>
    %cst_17 = arith.constant 1.000000e+00 : f32
    %38 = vector.broadcast %cst_17 : f32 to vector<8x512xf32>
    %39 = arith.subf %37, %38 : vector<8x512xf32>
    %40 = arith.select %35, %32, %39 : vector<8x512xi1>, vector<8x512xf32>
    %c0_18 = arith.constant 0 : index
    %c0_19 = arith.constant 0 : index
    %41 = vector.load %arg4[%c0_18, %c0_19] : memref<512x256xf32, #tpu.memory_space<vmem>>, vector<512x256xf32>
    %cst_20 = arith.constant dense<0.000000e+00> : vector<8x256xf32>
    %42 = tpu.matmul %40, %41, %cst_20 {dimension_numbers = #tpu.dot_dimension_numbers<[1], [0], [0], [1], [0, 0, 1, 1], [], []>} : vector<8x512xf32>, vector<512x256xf32>, vector<8x256xf32> -> vector<8x256xf32>
    %c3 = arith.constant 3 : index
    %c0_21 = arith.constant 0 : index
    %43 = vector.load %arg7[%c3, %c0_21] : memref<16x512xf32, #tpu.memory_space<vmem>>, vector<1x256xf32>
    %44 = vector.broadcast %43 : vector<1x256xf32> to vector<8x256xf32>
    %45 = arith.addf %42, %44 : vector<8x256xf32>
    %cst_22 = arith.constant dense<0.000000e+00> : vector<8xf32>
    %46 = vector.multi_reduction <add>, %45, %cst_22 [1] : vector<8x256xf32> to vector<8xf32>
    %47 = vector.shape_cast %46 : vector<8xf32> to vector<8x1xf32>
    %48 = arith.mulf %45, %45 : vector<8x256xf32>
    %cst_23 = arith.constant dense<0.000000e+00> : vector<8xf32>
    %49 = vector.multi_reduction <add>, %48, %cst_23 [1] : vector<8x256xf32> to vector<8xf32>
    %50 = vector.shape_cast %49 : vector<8xf32> to vector<8x1xf32>
    %cst_24 = arith.constant 3.906250e-03 : f32
    %51 = vector.broadcast %cst_24 : f32 to vector<8x1xf32>
    %52 = arith.mulf %47, %51 : vector<8x1xf32>
    %cst_25 = arith.constant 3.906250e-03 : f32
    %53 = vector.broadcast %cst_25 : f32 to vector<8x1xf32>
    %54 = arith.mulf %50, %53 : vector<8x1xf32>
    %55 = arith.mulf %52, %52 : vector<8x1xf32>
    %56 = arith.subf %54, %55 : vector<8x1xf32>
    %cst_26 = arith.constant 0.000000e+00 : f32
    %57 = vector.broadcast %cst_26 : f32 to vector<8x1xf32>
    %58 = arith.maximumf %56, %57 : vector<8x1xf32>
    %cst_27 = arith.constant 9.99999974E-6 : f32
    %59 = vector.broadcast %cst_27 : f32 to vector<8x1xf32>
    %60 = arith.addf %58, %59 : vector<8x1xf32>
    %61 = math.rsqrt %60 : vector<8x1xf32>
    %62 = vector.broadcast %52 : vector<8x1xf32> to vector<8x256xf32>
    %63 = arith.subf %45, %62 : vector<8x256xf32>
    %64 = vector.broadcast %61 : vector<8x1xf32> to vector<8x256xf32>
    %65 = arith.mulf %63, %64 : vector<8x256xf32>
    %c4 = arith.constant 4 : index
    %c0_28 = arith.constant 0 : index
    %66 = vector.load %arg7[%c4, %c0_28] : memref<16x512xf32, #tpu.memory_space<vmem>>, vector<1x256xf32>
    %67 = vector.broadcast %66 : vector<1x256xf32> to vector<8x256xf32>
    %68 = arith.mulf %65, %67 : vector<8x256xf32>
    %c5 = arith.constant 5 : index
    %c0_29 = arith.constant 0 : index
    %69 = vector.load %arg7[%c5, %c0_29] : memref<16x512xf32, #tpu.memory_space<vmem>>, vector<1x256xf32>
    %70 = vector.broadcast %69 : vector<1x256xf32> to vector<8x256xf32>
    %71 = arith.addf %68, %70 : vector<8x256xf32>
    %cst_30 = arith.constant 0.000000e+00 : f32
    %72 = vector.broadcast %cst_30 : f32 to vector<8x256xf32>
    %cst_31 = arith.constant 0.000000e+00 : f32
    %73 = vector.broadcast %cst_31 : f32 to vector<8x256xf32>
    %74 = arith.cmpf ogt, %71, %73 : vector<8x256xf32>
    %75 = arith.minimumf %71, %72 : vector<8x256xf32>
    %76 = math.exp %75 : vector<8x256xf32>
    %cst_32 = arith.constant 1.000000e+00 : f32
    %77 = vector.broadcast %cst_32 : f32 to vector<8x256xf32>
    %78 = arith.subf %76, %77 : vector<8x256xf32>
    %79 = arith.select %74, %71, %78 : vector<8x256xi1>, vector<8x256xf32>
    %c0_33 = arith.constant 0 : index
    %c0_34 = arith.constant 0 : index
    %80 = vector.load %arg5[%c0_33, %c0_34] : memref<8x128xf32, #tpu.memory_space<vmem>>, vector<8x128xf32>
    %cst_35 = arith.constant dense<0.000000e+00> : vector<8x128xf32>
    %81 = tpu.matmul %1, %80, %cst_35 {dimension_numbers = #tpu.dot_dimension_numbers<[1], [0], [0], [1], [0, 0, 1, 1], [], []>} : vector<8x8xf32>, vector<8x128xf32>, vector<8x128xf32> -> vector<8x128xf32>
    %c6 = arith.constant 6 : index
    %c0_36 = arith.constant 0 : index
    %82 = vector.load %arg7[%c6, %c0_36] : memref<16x512xf32, #tpu.memory_space<vmem>>, vector<1x128xf32>
    %83 = vector.broadcast %82 : vector<1x128xf32> to vector<8x128xf32>
    %84 = arith.addf %81, %83 : vector<8x128xf32>
    %cst_37 = arith.constant dense<0.000000e+00> : vector<8xf32>
    %85 = vector.multi_reduction <add>, %84, %cst_37 [1] : vector<8x128xf32> to vector<8xf32>
    %86 = vector.shape_cast %85 : vector<8xf32> to vector<8x1xf32>
    %87 = arith.mulf %84, %84 : vector<8x128xf32>
    %cst_38 = arith.constant dense<0.000000e+00> : vector<8xf32>
    %88 = vector.multi_reduction <add>, %87, %cst_38 [1] : vector<8x128xf32> to vector<8xf32>
    %89 = vector.shape_cast %88 : vector<8xf32> to vector<8x1xf32>
    %cst_39 = arith.constant 7.812500e-03 : f32
    %90 = vector.broadcast %cst_39 : f32 to vector<8x1xf32>
    %91 = arith.mulf %86, %90 : vector<8x1xf32>
    %cst_40 = arith.constant 7.812500e-03 : f32
    %92 = vector.broadcast %cst_40 : f32 to vector<8x1xf32>
    %93 = arith.mulf %89, %92 : vector<8x1xf32>
    %94 = arith.mulf %91, %91 : vector<8x1xf32>
    %95 = arith.subf %93, %94 : vector<8x1xf32>
    %cst_41 = arith.constant 0.000000e+00 : f32
    %96 = vector.broadcast %cst_41 : f32 to vector<8x1xf32>
    %97 = arith.maximumf %95, %96 : vector<8x1xf32>
    %cst_42 = arith.constant 9.99999974E-6 : f32
    %98 = vector.broadcast %cst_42 : f32 to vector<8x1xf32>
    %99 = arith.addf %97, %98 : vector<8x1xf32>
    %100 = math.rsqrt %99 : vector<8x1xf32>
    %101 = vector.broadcast %91 : vector<8x1xf32> to vector<8x128xf32>
    %102 = arith.subf %84, %101 : vector<8x128xf32>
    %103 = vector.broadcast %100 : vector<8x1xf32> to vector<8x128xf32>
    %104 = arith.mulf %102, %103 : vector<8x128xf32>
    %c7 = arith.constant 7 : index
    %c0_43 = arith.constant 0 : index
    %105 = vector.load %arg7[%c7, %c0_43] : memref<16x512xf32, #tpu.memory_space<vmem>>, vector<1x128xf32>
    %106 = vector.broadcast %105 : vector<1x128xf32> to vector<8x128xf32>
    %107 = arith.mulf %104, %106 : vector<8x128xf32>
    %c8 = arith.constant 8 : index
    %c0_44 = arith.constant 0 : index
    %108 = vector.load %arg7[%c8, %c0_44] : memref<16x512xf32, #tpu.memory_space<vmem>>, vector<1x128xf32>
    %109 = vector.broadcast %108 : vector<1x128xf32> to vector<8x128xf32>
    %110 = arith.addf %107, %109 : vector<8x128xf32>
    %cst_45 = arith.constant 0.000000e+00 : f32
    %111 = vector.broadcast %cst_45 : f32 to vector<8x128xf32>
    %cst_46 = arith.constant 0.000000e+00 : f32
    %112 = vector.broadcast %cst_46 : f32 to vector<8x128xf32>
    %113 = arith.cmpf ogt, %110, %112 : vector<8x128xf32>
    %114 = arith.minimumf %110, %111 : vector<8x128xf32>
    %115 = math.exp %114 : vector<8x128xf32>
    %cst_47 = arith.constant 1.000000e+00 : f32
    %116 = vector.broadcast %cst_47 : f32 to vector<8x128xf32>
    %117 = arith.subf %115, %116 : vector<8x128xf32>
    %118 = arith.select %113, %110, %117 : vector<8x128xi1>, vector<8x128xf32>
    %c0_48 = arith.constant 0 : index
    %c0_49 = arith.constant 0 : index
    %119 = vector.load %arg6[%c0_48, %c0_49] : memref<128x64xf32, #tpu.memory_space<vmem>>, vector<128x64xf32>
    %cst_50 = arith.constant dense<0.000000e+00> : vector<8x64xf32>
    %120 = tpu.matmul %118, %119, %cst_50 {dimension_numbers = #tpu.dot_dimension_numbers<[1], [0], [0], [1], [0, 0, 1, 1], [], []>} : vector<8x128xf32>, vector<128x64xf32>, vector<8x64xf32> -> vector<8x64xf32>
    %c9 = arith.constant 9 : index
    %c0_51 = arith.constant 0 : index
    %121 = vector.load %arg7[%c9, %c0_51] : memref<16x512xf32, #tpu.memory_space<vmem>>, vector<1x64xf32>
    %122 = vector.broadcast %121 : vector<1x64xf32> to vector<8x64xf32>
    %123 = arith.addf %120, %122 : vector<8x64xf32>
    %cst_52 = arith.constant dense<0.000000e+00> : vector<8xf32>
    %124 = vector.multi_reduction <add>, %123, %cst_52 [1] : vector<8x64xf32> to vector<8xf32>
    %125 = vector.shape_cast %124 : vector<8xf32> to vector<8x1xf32>
    %126 = arith.mulf %123, %123 : vector<8x64xf32>
    %cst_53 = arith.constant dense<0.000000e+00> : vector<8xf32>
    %127 = vector.multi_reduction <add>, %126, %cst_53 [1] : vector<8x64xf32> to vector<8xf32>
    %128 = vector.shape_cast %127 : vector<8xf32> to vector<8x1xf32>
    %cst_54 = arith.constant 1.562500e-02 : f32
    %129 = vector.broadcast %cst_54 : f32 to vector<8x1xf32>
    %130 = arith.mulf %125, %129 : vector<8x1xf32>
    %cst_55 = arith.constant 1.562500e-02 : f32
    %131 = vector.broadcast %cst_55 : f32 to vector<8x1xf32>
    %132 = arith.mulf %128, %131 : vector<8x1xf32>
    %133 = arith.mulf %130, %130 : vector<8x1xf32>
    %134 = arith.subf %132, %133 : vector<8x1xf32>
    %cst_56 = arith.constant 0.000000e+00 : f32
    %135 = vector.broadcast %cst_56 : f32 to vector<8x1xf32>
    %136 = arith.maximumf %134, %135 : vector<8x1xf32>
    %cst_57 = arith.constant 9.99999974E-6 : f32
    %137 = vector.broadcast %cst_57 : f32 to vector<8x1xf32>
    %138 = arith.addf %136, %137 : vector<8x1xf32>
    %139 = math.rsqrt %138 : vector<8x1xf32>
    %140 = vector.broadcast %130 : vector<8x1xf32> to vector<8x64xf32>
    %141 = arith.subf %123, %140 : vector<8x64xf32>
    %142 = vector.broadcast %139 : vector<8x1xf32> to vector<8x64xf32>
    %143 = arith.mulf %141, %142 : vector<8x64xf32>
    %c10 = arith.constant 10 : index
    %c0_58 = arith.constant 0 : index
    %144 = vector.load %arg7[%c10, %c0_58] : memref<16x512xf32, #tpu.memory_space<vmem>>, vector<1x64xf32>
    %145 = vector.broadcast %144 : vector<1x64xf32> to vector<8x64xf32>
    %146 = arith.mulf %143, %145 : vector<8x64xf32>
    %c11 = arith.constant 11 : index
    %c0_59 = arith.constant 0 : index
    %147 = vector.load %arg7[%c11, %c0_59] : memref<16x512xf32, #tpu.memory_space<vmem>>, vector<1x64xf32>
    %148 = vector.broadcast %147 : vector<1x64xf32> to vector<8x64xf32>
    %149 = arith.addf %146, %148 : vector<8x64xf32>
    %cst_60 = arith.constant 0.000000e+00 : f32
    %150 = vector.broadcast %cst_60 : f32 to vector<8x64xf32>
    %cst_61 = arith.constant 0.000000e+00 : f32
    %151 = vector.broadcast %cst_61 : f32 to vector<8x64xf32>
    %152 = arith.cmpf ogt, %149, %151 : vector<8x64xf32>
    %153 = arith.minimumf %149, %150 : vector<8x64xf32>
    %154 = math.exp %153 : vector<8x64xf32>
    %cst_62 = arith.constant 1.000000e+00 : f32
    %155 = vector.broadcast %cst_62 : f32 to vector<8x64xf32>
    %156 = arith.subf %154, %155 : vector<8x64xf32>
    %157 = arith.select %152, %149, %156 : vector<8x64xi1>, vector<8x64xf32>
    %c12 = arith.constant 12 : index
    %c0_63 = arith.constant 0 : index
    %158 = vector.load %arg7[%c12, %c0_63] : memref<16x512xf32, #tpu.memory_space<vmem>>, vector<1x256xf32>
    %159 = vector.broadcast %158 : vector<1x256xf32> to vector<8x256xf32>
    %160 = arith.mulf %79, %159 : vector<8x256xf32>
    %cst_64 = arith.constant dense<0.000000e+00> : vector<8xf32>
    %161 = vector.multi_reduction <add>, %160, %cst_64 [1] : vector<8x256xf32> to vector<8xf32>
    %162 = vector.shape_cast %161 : vector<8xf32> to vector<8x1xf32>
    %c13 = arith.constant 13 : index
    %c0_65 = arith.constant 0 : index
    %163 = vector.load %arg7[%c13, %c0_65] : memref<16x512xf32, #tpu.memory_space<vmem>>, vector<1x64xf32>
    %164 = vector.broadcast %163 : vector<1x64xf32> to vector<8x64xf32>
    %165 = arith.mulf %157, %164 : vector<8x64xf32>
    %cst_66 = arith.constant dense<0.000000e+00> : vector<8xf32>
    %166 = vector.multi_reduction <add>, %165, %cst_66 [1] : vector<8x64xf32> to vector<8xf32>
    %167 = vector.shape_cast %166 : vector<8xf32> to vector<8x1xf32>
    %168 = arith.addf %162, %167 : vector<8x1xf32>
    %c14 = arith.constant 14 : index
    %c0_67 = arith.constant 0 : index
    %169 = vector.load %arg7[%c14, %c0_67] : memref<16x512xf32, #tpu.memory_space<vmem>>, vector<1x1xf32>
    %170 = vector.broadcast %169 : vector<1x1xf32> to vector<8x1xf32>
    %171 = arith.addf %168, %170 : vector<8x1xf32>
    %c0_68 = arith.constant 0 : index
    %c0_69 = arith.constant 0 : index
    %172 = vector.load %arg8[%c0_68, %c0_69] : memref<8x1xf32, #tpu.memory_space<vmem>>, vector<8x1xf32>
    tpu.vector_store %arg8[%c0_68, %c0_69], %171 {strides = array<i32>} : memref<8x1xf32, #tpu.memory_space<vmem>>, vector<8x1xf32>,
    return
  }
  func.func @transform_0(%arg0: i32) -> (i32, i32) {
    %c0_i32 = arith.constant 0 : i32
    %c0_i32_0 = arith.constant 0 : i32
    return %arg0, %c0_i32 : i32, i32
  }
  func.func @transform_1(%arg0: i32) -> (i32, i32) {
    %c0_i32 = arith.constant 0 : i32
    %c0_i32_0 = arith.constant 0 : i32
    return %arg0, %c0_i32 : i32, i32
  }
  func.func @transform_2(%arg0: i32) -> (i32, i32) {
    %c0_i32 = arith.constant 0 : i32
    %c0_i32_0 = arith.constant 0 : i32
    %c0_i32_1 = arith.constant 0 : i32
    return %c0_i32, %c0_i32_0 : i32, i32
  }
  func.func @transform_3(%arg0: i32) -> (i32, i32) {
    %c0_i32 = arith.constant 0 : i32
    %c0_i32_0 = arith.constant 0 : i32
    %c0_i32_1 = arith.constant 0 : i32
    return %c0_i32, %c0_i32_0 : i32, i32
  }
  func.func @transform_4(%arg0: i32) -> (i32, i32) {
    %c0_i32 = arith.constant 0 : i32
    %c0_i32_0 = arith.constant 0 : i32
    %c0_i32_1 = arith.constant 0 : i32
    return %c0_i32, %c0_i32_0 : i32, i32
  }
  func.func @transform_5(%arg0: i32) -> (i32, i32) {
    %c0_i32 = arith.constant 0 : i32
    %c0_i32_0 = arith.constant 0 : i32
    %c0_i32_1 = arith.constant 0 : i32
    return %c0_i32, %c0_i32_0 : i32, i32
  }
  func.func @transform_6(%arg0: i32) -> (i32, i32) {
    %c0_i32 = arith.constant 0 : i32
    %c0_i32_0 = arith.constant 0 : i32
    %c0_i32_1 = arith.constant 0 : i32
    return %c0_i32, %c0_i32_0 : i32, i32
  }
  func.func @transform_7(%arg0: i32) -> (i32, i32) {
    %c0_i32 = arith.constant 0 : i32
    %c0_i32_0 = arith.constant 0 : i32
    return %arg0, %c0_i32 : i32, i32
  }
}

</mosaic_0001>

<llo_original>
// kernel: critic_forward.1
$region0: #{critic_forward.1}
  #allocation0 [shape = 'u32[]', space=smem, size = 0x4, offset = 0x4, fixed_abs, tag = 'smem constant byte address 0x4 - core index']
  #allocation1 [shape = 'u32[72,128]{1,0:T(1,128)}', space=vmem, size = 0x9000, scoped, tag = 'internal scratch']
  %s0 = inlined_call_operand.vmem [shape: f32[8,32], index: 0, kind: input, shape index: {}]
  %s1 = inlined_call_operand.vmem [shape: f32[8,8], index: 1, kind: input, shape index: {}]
  %s2 = inlined_call_operand.vmem [shape: f32[32,512], index: 2, kind: input, shape index: {}]
  %s3 = inlined_call_operand.hbm [shape: f32[512,256], index: 3, kind: input, shape index: {}]
  %s4 = inlined_call_operand.vmem [shape: f32[8,128], index: 4, kind: input, shape index: {}]
  %s5 = inlined_call_operand.vmem [shape: f32[128,64], index: 5, kind: input, shape index: {}]
  %s6 = inlined_call_operand.vmem [shape: f32[16,512], index: 6, kind: input, shape index: {}]
  %s7 = inlined_call_operand.vmem [shape: f32[8,1], index: 7, kind: output, shape index: {}]
  %s8 = sld [smem:[#allocation0]]
  $region42: #{critic_forward.1} parent=0
    _
  %s10 = ssub.s32 1, %s8
  %s11 = scalar_select 0, %s10, %s8
  $region1: #{critic_forward.1} parent=0
    #allocation2 [shape = 'u8[524288]{0}', space=vmem, size = 0x80000, scoped, tag = 'input window, operand 3, single buffered']
    #allocation3 [shape = 's32[1]{0}', space=sflag, size = 0x4, scoped, tag = 'scoped memory for critic_forward.1']
    %12 = vsyncpa [#allocation3], 0
    // Predicated region
    $region2: #{critic_forward.1} parent=1 // pred_check
      _
    $region3: #{critic_forward.1} parent=1 // pred_check_branch
      %14 = sbr.rel (0) target = $region5
    $region4: #{critic_forward.1} parent=1 // pred_region
      _
    $region5: #{critic_forward.1} parent=1 // pred_fallthru
      _
    // Predicated region
    $region6: #{critic_forward.1} parent=1 // pred_check
      _
    $region7: #{critic_forward.1} parent=1 // pred_check_branch
      %16 = sbr.rel (0) target = $region9
    $region8: #{critic_forward.1} parent=1 // pred_region
      _
    $region9: #{critic_forward.1} parent=1 // pred_fallthru
      _
    // Predicated region
    $region10: #{critic_forward.1} parent=1 // pred_check
      _
    $region11: #{critic_forward.1} parent=1 // pred_check_branch
      %18 = sbr.rel (0) target = $region13
    $region12: #{critic_forward.1} parent=1 // pred_region
      _
    $region13: #{critic_forward.1} parent=1 // pred_fallthru
      _
    // Predicated region
    $region14: #{critic_forward.1} parent=1 // pred_check
      _
    $region15: #{critic_forward.1} parent=1 // pred_check_branch
      %20 = sbr.rel (0) target = $region17
    $region16: #{critic_forward.1} parent=1 // pred_region
      %22 = vsyncadd [#allocation3], 0
      %s23 = sshll.u32 %s3, 4
      %s24 = int_to_ptr.hbm [resolvable:$true] %s23
      %s25 = sshll.u32 [#allocation2], 4
      %s26 = int_to_ptr.vmem [resolvable:$true] %s25
      %31 = dma.hbm_to_vmem [thread:$0]  %s24, 16384, %s26, [#allocation3], 256, 256, 16
    $region17: #{critic_forward.1} parent=1 // pred_fallthru
      _
    // Predicated region
    $region18: #{critic_forward.1} parent=1 // pred_check
      _
    $region19: #{critic_forward.1} parent=1 // pred_check_branch
      %33 = sbr.rel (0) target = $region21
    $region20: #{critic_forward.1} parent=1 // pred_region
      _
    $region21: #{critic_forward.1} parent=1 // pred_fallthru
      _
    // Predicated region
    $region22: #{critic_forward.1} parent=1 // pred_check
      _
    $region23: #{critic_forward.1} parent=1 // pred_check_branch
      %35 = sbr.rel (0) target = $region25
    $region24: #{critic_forward.1} parent=1 // pred_region
      _
    $region25: #{critic_forward.1} parent=1 // pred_fallthru
      _
    // Predicated region
    $region26: #{critic_forward.1} parent=1 // pred_check
      _
    $region27: #{critic_forward.1} parent=1 // pred_check_branch
      %37 = sbr.rel (0) target = $region29
    $region28: #{critic_forward.1} parent=1 // pred_region
      _
    $region29: #{critic_forward.1} parent=1 // pred_fallthru
      _
    // Predicated region
    $region30: #{critic_forward.1} parent=1 // pred_check
      _
    $region31: #{critic_forward.1} parent=1 // pred_check_branch
      %39 = sbr.rel (0) target = $region33
    $region32: #{critic_forward.1} parent=1 // pred_region
      %41 = dma.done [#allocation3], 16384
    $region33: #{critic_forward.1} parent=1 // pred_fallthru
      _
    %v42 = vld [vmem:[%s0] sm:$0xff]
    %v43 = vld [vmem:[%s1] sm:$0xff]
    %v44 = vld [vmem:[%s2] sm:$0xff]
    %v45 = vld [vmem:[%s2 + $0x8] sm:$0xff]
    %v46 = vld [vmem:[%s2 + $0x10] sm:$0xff]
    %v47 = vld [vmem:[%s2 + $0x18] sm:$0xff]
    %v48 = vld [vmem:[%s2 + $0x20] sm:$0xff]
    %v49 = vld [vmem:[%s2 + $0x28] sm:$0xff]
    %v50 = vld [vmem:[%s2 + $0x30] sm:$0xff]
    %v51 = vld [vmem:[%s2 + $0x38] sm:$0xff]
    %v52 = vld [vmem:[%s2 + $0x40] sm:$0xff]
    %v53 = vld [vmem:[%s2 + $0x48] sm:$0xff]
    %v54 = vld [vmem:[%s2 + $0x50] sm:$0xff]
    %v55 = vld [vmem:[%s2 + $0x58] sm:$0xff]
    %v56 = vld [vmem:[%s2 + $0x60] sm:$0xff]
    %v57 = vld [vmem:[%s2 + $0x68] sm:$0xff]
    %v58 = vld [vmem:[%s2 + $0x70] sm:$0xff]
    %v59 = vld [vmem:[%s2 + $0x78] sm:$0xff]
    %v60 = vld [vmem:[%s6] ss:$8 sm:$0xf]
    %v62 = vperm.slane %v60, 0
    %v63 = vperm.slane %v60, 1
    %v64 = vperm.slane %v60, 2
    %v65 = vperm.slane %v60, 3
    %vm70 = vcmask 261120
    %v72 = vsel %vm70, %v42, 0
    %74 = vmatpush.msra.mxu0 0.0
    %75 = vmatpush.msra.mxu0 0.0
    %76 = vmatpush.msra.mxu0 0.0
    %77 = vmatpush.msra.mxu0 0.0
    %78 = vmatpush.msra.mxu0 0.0
    %79 = vmatpush.msra.mxu0 0.0
    %80 = vmatpush.msra.mxu0 0.0
    %81 = vmatpush.msra.mxu0 0.0
    %82 = vmatpush.msra.mxu0 0.0
    %83 = vmatpush.msra.mxu0 0.0
    %84 = vmatpush.msra.mxu0 0.0
    %85 = vmatpush.msra.mxu0 0.0
    %86 = vmatpush.msra.mxu0 %v56
    %87 = vmatpush.msra.mxu0 %v52
    %88 = vmatpush.msra.mxu0 %v48
    %89 = vmatpush.msra.mxu0 %v44
    %90 = vmatmul.f32.gmra.mxu0 %v72
    %v91 = vpop.f32.mrf.mxu0
    %v92 = vadd.f32 %v62, %v91
    %93 = vdwg.mxu0
    %94 = vmatpush.msra.mxu0 0.0
    %95 = vmatpush.msra.mxu0 0.0
    %96 = vmatpush.msra.mxu0 0.0
    %97 = vmatpush.msra.mxu0 0.0
    %98 = vmatpush.msra.mxu0 0.0
    %99 = vmatpush.msra.mxu0 0.0
    %100 = vmatpush.msra.mxu0 0.0
    %101 = vmatpush.msra.mxu0 0.0
    %102 = vmatpush.msra.mxu0 0.0
    %103 = vmatpush.msra.mxu0 0.0
    %104 = vmatpush.msra.mxu0 0.0
    %105 = vmatpush.msra.mxu0 0.0
    %106 = vmatpush.msra.mxu0 %v57
    %107 = vmatpush.msra.mxu0 %v53
    %108 = vmatpush.msra.mxu0 %v49
    %109 = vmatpush.msra.mxu0 %v45
    %110 = vmatmul.f32.gmra.mxu0 %v72
    %v111 = vpop.f32.mrf.mxu0
    %v112 = vadd.f32 %v63, %v111
    %113 = vdwg.mxu0
    %114 = vmatpush.msra.mxu0 0.0
    %115 = vmatpush.msra.mxu0 0.0
    %116 = vmatpush.msra.mxu0 0.0
    %117 = vmatpush.msra.mxu0 0.0
    %118 = vmatpush.msra.mxu0 0.0
    %119 = vmatpush.msra.mxu0 0.0
    %120 = vmatpush.msra.mxu0 0.0
    %121 = vmatpush.msra.mxu0 0.0
    %122 = vmatpush.msra.mxu0 0.0
    %123 = vmatpush.msra.mxu0 0.0
    %124 = vmatpush.msra.mxu0 0.0
    %125 = vmatpush.msra.mxu0 0.0
    %126 = vmatpush.msra.mxu0 %v58
    %127 = vmatpush.msra.mxu0 %v54
    %128 = vmatpush.msra.mxu0 %v50
    %129 = vmatpush.msra.mxu0 %v46
    %130 = vmatmul.f32.gmra.mxu0 %v72
    %v131 = vpop.f32.mrf.mxu0
    %v132 = vadd.f32 %v64, %v131
    %133 = vdwg.mxu0
    %134 = vmatpush.msra.mxu0 0.0
    %135 = vmatpush.msra.mxu0 0.0
    %136 = vmatpush.msra.mxu0 0.0
    %137 = vmatpush.msra.mxu0 0.0
    %138 = vmatpush.msra.mxu0 0.0
    %139 = vmatpush.msra.mxu0 0.0
    %140 = vmatpush.msra.mxu0 0.0
    %141 = vmatpush.msra.mxu0 0.0
    %142 = vmatpush.msra.mxu0 0.0
    %143 = vmatpush.msra.mxu0 0.0
    %144 = vmatpush.msra.mxu0 0.0
    %145 = vmatpush.msra.mxu0 0.0
    %146 = vmatpush.msra.mxu0 %v59
    %147 = vmatpush.msra.mxu0 %v55
    %148 = vmatpush.msra.mxu0 %v51
    %149 = vmatpush.msra.mxu0 %v47
    %150 = vmatmul.f32.gmra.mxu0 %v72
    %v151 = vpop.f32.mrf.mxu0
    %v152 = vadd.f32 %v65, %v151
    %153 = vdwg.mxu0
    %v154 = vadd.f32 %v92, %v112
    %v155 = vadd.f32 %v154, %v132
    %v156 = vadd.f32 %v155, %v152
    %157 = vadd.xlane.f32.xlu0 %v156
    %v158 = vpop.xlane.xlu0 %157
    %v159 = vmul.f32 %v92, %v92
    %v160 = vmul.f32 %v112, %v112
    %v161 = vmul.f32 %v132, %v132
    %v162 = vmul.f32 %v152, %v152
    %v163 = vadd.f32 %v159, %v160
    %v164 = vadd.f32 %v163, %v161
    %v165 = vadd.f32 %v164, %v162
    %166 = vadd.xlane.f32.xlu0 %v165
    %v167 = vpop.xlane.xlu0 %166
    %v168 = vmul.f32 %v158, 0.001953125
    %v169 = vmul.f32 %v167, 0.001953125
    %v170 = vmul.f32 %v168, %v168
    %v171 = vsub.f32 %v169, %v170
    %v172 = vmax.f32 %v171, 0.0
    %v173 = vadd.f32 %v172, 1e-05
    %v174 = vrsqrt.pop %v173
    %v175 = vmul.f32 %v174, %v173
    %v176 = vmul.f32 %v175, %v174
    %v177 = vmul.f32 0.5, %v176
    %v178 = vsub.f32 1.5, %v177
    %v179 = vmul.f32 %v174, %v178
    %vm180 = vweird.f32 %v173
    %vm181 = vweird.f32 %v174
    %vm182 = vmor %vm180, %vm181
    %v183 = vsel %vm182, %v174, %v179
    %v184 = vsub.f32 %v92, %v168
    %v185 = vsub.f32 %v112, %v168
    %v186 = vsub.f32 %v132, %v168
    %v187 = vsub.f32 %v152, %v168
    %v188 = vmul.f32 %v184, %v183
    %v189 = vmul.f32 %v185, %v183
    %v190 = vmul.f32 %v186, %v183
    %v191 = vmul.f32 %v187, %v183
    %s192 = scalar_lea.vmem %s6, 1
    %v193 = vld [vmem:[%s192] ss:$8 sm:$0xf]
    %v195 = vperm.slane %v193, 0
    %v196 = vperm.slane %v193, 1
    %v197 = vperm.slane %v193, 2
    %v198 = vperm.slane %v193, 3
    %v203 = vmul.f32 %v188, %v195
    %v204 = vmul.f32 %v189, %v196
    %v205 = vmul.f32 %v190, %v197
    %v206 = vmul.f32 %v191, %v198
    %s207 = scalar_lea.vmem %s6, 2
    %v208 = vld [vmem:[%s207] ss:$8 sm:$0xf]
    %v210 = vperm.slane %v208, 0
    %v211 = vperm.slane %v208, 1
    %v212 = vperm.slane %v208, 2
    %v213 = vperm.slane %v208, 3
    %v218 = vadd.f32 %v203, %v210
    %v219 = vadd.f32 %v204, %v211
    %v220 = vadd.f32 %v205, %v212
    %v221 = vadd.f32 %v206, %v213
    %vm222 = vcmp.gt.f32.partialorder %v218, 0.0
    %vm223 = vcmp.gt.f32.partialorder %v219, 0.0
    %vm224 = vcmp.gt.f32.partialorder %v220, 0.0
    %vm225 = vcmp.gt.f32.partialorder %v221, 0.0
    %v226 = vmin.f32 %v218, 0.0
    %v227 = vmin.f32 %v219, 0.0
    %v228 = vmin.f32 %v220, 0.0
    %v229 = vmin.f32 %v221, 0.0
    %v230 = vmul.f32 %v226, 1.442695
    %v231 = vpow.pop %v230
    %v232 = vmul.f32 %v227, 1.442695
    %v233 = vpow.pop %v232
    %v234 = vmul.f32 %v228, 1.442695
    %v235 = vpow.pop %v234
    %v236 = vmul.f32 %v229, 1.442695
    %v237 = vpow.pop %v236
    %v238 = vsub.f32 %v231, 1.0
    %v239 = vsub.f32 %v233, 1.0
    %v240 = vsub.f32 %v235, 1.0
    %v241 = vsub.f32 %v237, 1.0
    %v242 = vsel %vm222, %v218, %v238
    %v243 = vsel %vm223, %v219, %v239
    %v244 = vsel %vm224, %v220, %v240
    %v245 = vsel %vm225, %v221, %v241
    %v246 = vld [vmem:[#allocation2] sm:$0xff]
    %v247 = vld [vmem:[#allocation2 + $0x8] sm:$0xff]
    %v248 = vld [vmem:[#allocation2 + $0x10] sm:$0xff]
    %v249 = vld [vmem:[#allocation2 + $0x18] sm:$0xff]
    %v250 = vld [vmem:[#allocation2 + $0x20] sm:$0xff]
    %v251 = vld [vmem:[#allocation2 + $0x28] sm:$0xff]
    %v252 = vld [vmem:[#allocation2 + $0x30] sm:$0xff]
    %v253 = vld [vmem:[#allocation2 + $0x38] sm:$0xff]
    %v254 = vld [vmem:[#allocation2 + $0x40] sm:$0xff]
    %v255 = vld [vmem:[#allocation2 + $0x48] sm:$0xff]
    %v256 = vld [vmem:[#allocation2 + $0x50] sm:$0xff]
    %v257 = vld [vmem:[#allocation2 + $0x58] sm:$0xff]
    %v258 = vld [vmem:[#allocation2 + $0x60] sm:$0xff]
    %v259 = vld [vmem:[#allocation2 + $0x68] sm:$0xff]
    %v260 = vld [vmem:[#allocation2 + $0x70] sm:$0xff]
    %v261 = vld [vmem:[#allocation2 + $0x78] sm:$0xff]
    %v262 = vld [vmem:[#allocation2 + $0x80] sm:$0xff]
    %v263 = vld [vmem:[#allocation2 + $0x88] sm:$0xff]
    %v264 = vld [vmem:[#allocation2 + $0x90] sm:$0xff]
    %v265 = vld [vmem:[#allocation2 + $0x98] sm:$0xff]
    %v266 = vld [vmem:[#allocation2 + $0xa0] sm:$0xff]
    %v267 = vld [vmem:[#allocation2 + $0xa8] sm:$0xff]
    %v268 = vld [vmem:[#allocation2 + $0xb0] sm:$0xff]
    %v269 = vld [vmem:[#allocation2 + $0xb8] sm:$0xff]
    %v270 = vld [vmem:[#allocation2 + $0xc0] sm:$0xff]
    %v271 = vld [vmem:[#allocation2 + $0xc8] sm:$0xff]
    %v272 = vld [vmem:[#allocation2 + $0xd0] sm:$0xff]
    %v273 = vld [vmem:[#allocation2 + $0xd8] sm:$0xff]
    %v274 = vld [vmem:[#allocation2 + $0xe0] sm:$0xff]
    %v275 = vld [vmem:[#allocation2 + $0xe8] sm:$0xff]
    %v276 = vld [vmem:[#allocation2 + $0xf0] sm:$0xff]
    %v277 = vld [vmem:[#allocation2 + $0xf8] sm:$0xff]
    %v278 = vld [vmem:[#allocation2 + $0x100] sm:$0xff]
    %v279 = vld [vmem:[#allocation2 + $0x108] sm:$0xff]
    %v280 = vld [vmem:[#allocation2 + $0x110] sm:$0xff]
    %v281 = vld [vmem:[#allocation2 + $0x118] sm:$0xff]
    %v282 = vld [vmem:[#allocation2 + $0x120] sm:$0xff]
    %v283 = vld [vmem:[#allocation2 + $0x128] sm:$0xff]
    %v284 = vld [vmem:[#allocation2 + $0x130] sm:$0xff]
    %v285 = vld [vmem:[#allocation2 + $0x138] sm:$0xff]
    %v286 = vld [vmem:[#allocation2 + $0x140] sm:$0xff]
    %v287 = vld [vmem:[#allocation2 + $0x148] sm:$0xff]
    %v288 = vld [vmem:[#allocation2 + $0x150] sm:$0xff]
    %v289 = vld [vmem:[#allocation2 + $0x158] sm:$0xff]
    %v290 = vld [vmem:[#allocation2 + $0x160] sm:$0xff]
    %v291 = vld [vmem:[#allocation2 + $0x168] sm:$0xff]
    %v292 = vld [vmem:[#allocation2 + $0x170] sm:$0xff]
    %v293 = vld [vmem:[#allocation2 + $0x178] sm:$0xff]
    %v294 = vld [vmem:[#allocation2 + $0x180] sm:$0xff]
    %v295 = vld [vmem:[#allocation2 + $0x188] sm:$0xff]
    %v296 = vld [vmem:[#allocation2 + $0x190] sm:$0xff]
    %v297 = vld [vmem:[#allocation2 + $0x198] sm:$0xff]
    %v298 = vld [vmem:[#allocation2 + $0x1a0] sm:$0xff]
    %v299 = vld [vmem:[#allocation2 + $0x1a8] sm:$0xff]
    %v300 = vld [vmem:[#allocation2 + $0x1b0] sm:$0xff]
    %v301 = vld [vmem:[#allocation2 + $0x1b8] sm:$0xff]
    %v302 = vld [vmem:[#allocation2 + $0x1c0] sm:$0xff]
    %v303 = vld [vmem:[#allocation2 + $0x1c8] sm:$0xff]
    %v304 = vld [vmem:[#allocation2 + $0x1d0] sm:$0xff]
    %v305 = vld [vmem:[#allocation2 + $0x1d8] sm:$0xff]
    %v306 = vld [vmem:[#allocation2 + $0x1e0] sm:$0xff]
    %v307 = vld [vmem:[#allocation2 + $0x1e8] sm:$0xff]
    %v308 = vld [vmem:[#allocation2 + $0x1f0] sm:$0xff]
    %v309 = vld [vmem:[#allocation2 + $0x1f8] sm:$0xff]
    %v310 = vld [vmem:[#allocation2 + $0x200] sm:$0xff]
    %v311 = vld [vmem:[#allocation2 + $0x208] sm:$0xff]
    %v312 = vld [vmem:[#allocation2 + $0x210] sm:$0xff]
    %v313 = vld [vmem:[#allocation2 + $0x218] sm:$0xff]
    %v314 = vld [vmem:[#allocation2 + $0x220] sm:$0xff]
    %v315 = vld [vmem:[#allocation2 + $0x228] sm:$0xff]
    %v316 = vld [vmem:[#allocation2 + $0x230] sm:$0xff]
    %v317 = vld [vmem:[#allocation2 + $0x238] sm:$0xff]
    %v318 = vld [vmem:[#allocation2 + $0x240] sm:$0xff]
    %v319 = vld [vmem:[#allocation2 + $0x248] sm:$0xff]
    %v320 = vld [vmem:[#allocation2 + $0x250] sm:$0xff]
    %v321 = vld [vmem:[#allocation2 + $0x258] sm:$0xff]
    %v322 = vld [vmem:[#allocation2 + $0x260] sm:$0xff]
    %v323 = vld [vmem:[#allocation2 + $0x268] sm:$0xff]
    %v324 = vld [vmem:[#allocation2 + $0x270] sm:$0xff]
    %v325 = vld [vmem:[#allocation2 + $0x278] sm:$0xff]
    %v326 = vld [vmem:[#allocation2 + $0x280] sm:$0xff]
    %v327 = vld [vmem:[#allocation2 + $0x288] sm:$0xff]
    %v328 = vld [vmem:[#allocation2 + $0x290] sm:$0xff]
    %v329 = vld [vmem:[#allocation2 + $0x298] sm:$0xff]
    %v330 = vld [vmem:[#allocation2 + $0x2a0] sm:$0xff]
    %v331 = vld [vmem:[#allocation2 + $0x2a8] sm:$0xff]
    %v332 = vld [vmem:[#allocation2 + $0x2b0] sm:$0xff]
    %v333 = vld [vmem:[#allocation2 + $0x2b8] sm:$0xff]
    %v334 = vld [vmem:[#allocation2 + $0x2c0] sm:$0xff]
    %v335 = vld [vmem:[#allocation2 + $0x2c8] sm:$0xff]
    %v336 = vld [vmem:[#allocation2 + $0x2d0] sm:$0xff]
    %v337 = vld [vmem:[#allocation2 + $0x2d8] sm:$0xff]
    %v338 = vld [vmem:[#allocation2 + $0x2e0] sm:$0xff]
    %v339 = vld [vmem:[#allocation2 + $0x2e8] sm:$0xff]
    %v340 = vld [vmem:[#allocation2 + $0x2f0] sm:$0xff]
    %v341 = vld [vmem:[#allocation2 + $0x2f8] sm:$0xff]
    %v342 = vld [vmem:[#allocation2 + $0x300] sm:$0xff]
    %v343 = vld [vmem:[#allocation2 + $0x308] sm:$0xff]
    %v344 = vld [vmem:[#allocation2 + $0x310] sm:$0xff]
    %v345 = vld [vmem:[#allocation2 + $0x318] sm:$0xff]
    %v346 = vld [vmem:[#allocation2 + $0x320] sm:$0xff]
    %v347 = vld [vmem:[#allocation2 + $0x328] sm:$0xff]
    %v348 = vld [vmem:[#allocation2 + $0x330] sm:$0xff]
    %v349 = vld [vmem:[#allocation2 + $0x338] sm:$0xff]
    %v350 = vld [vmem:[#allocation2 + $0x340] sm:$0xff]
    %v351 = vld [vmem:[#allocation2 + $0x348] sm:$0xff]
    %v352 = vld [vmem:[#allocation2 + $0x350] sm:$0xff]
    %v353 = vld [vmem:[#allocation2 + $0x358] sm:$0xff]
    %v354 = vld [vmem:[#allocation2 + $0x360] sm:$0xff]
    %v355 = vld [vmem:[#allocation2 + $0x368] sm:$0xff]
    %v356 = vld [vmem:[#allocation2 + $0x370] sm:$0xff]
    %v357 = vld [vmem:[#allocation2 + $0x378] sm:$0xff]
    %v358 = vld [vmem:[#allocation2 + $0x380] sm:$0xff]
    %v359 = vld [vmem:[#allocation2 + $0x388] sm:$0xff]
    %v360 = vld [vmem:[#allocation2 + $0x390] sm:$0xff]
    %v361 = vld [vmem:[#allocation2 + $0x398] sm:$0xff]
    %v362 = vld [vmem:[#allocation2 + $0x3a0] sm:$0xff]
    %v363 = vld [vmem:[#allocation2 + $0x3a8] sm:$0xff]
    %v364 = vld [vmem:[#allocation2 + $0x3b0] sm:$0xff]
    %v365 = vld [vmem:[#allocation2 + $0x3b8] sm:$0xff]
    %v366 = vld [vmem:[#allocation2 + $0x3c0] sm:$0xff]
    %v367 = vld [vmem:[#allocation2 + $0x3c8] sm:$0xff]
    %v368 = vld [vmem:[#allocation2 + $0x3d0] sm:$0xff]
    %v369 = vld [vmem:[#allocation2 + $0x3d8] sm:$0xff]
    %v370 = vld [vmem:[#allocation2 + $0x3e0] sm:$0xff]
    %v371 = vld [vmem:[#allocation2 + $0x3e8] sm:$0xff]
    %v372 = vld [vmem:[#allocation2 + $0x3f0] sm:$0xff]
    %v373 = vld [vmem:[#allocation2 + $0x3f8] sm:$0xff]
    %s374 = scalar_lea.vmem %s6, 3
    %v375 = vld [vmem:[%s374] ss:$8 sm:$0x3]
    %v377 = vperm.slane %v375, 0
    %v378 = vperm.slane %v375, 1
    %381 = vmatpush.msra.mxu0 %v276
    %382 = vmatpush.msra.mxu0 %v274
    %383 = vmatpush.msra.mxu0 %v272
    %384 = vmatpush.msra.mxu0 %v270
    %385 = vmatpush.msra.mxu0 %v268
    %386 = vmatpush.msra.mxu0 %v266
    %387 = vmatpush.msra.mxu0 %v264
    %388 = vmatpush.msra.mxu0 %v262
    %389 = vmatpush.msra.mxu0 %v260
    %390 = vmatpush.msra.mxu0 %v258
    %391 = vmatpush.msra.mxu0 %v256
    %392 = vmatpush.msra.mxu0 %v254
    %393 = vmatpush.msra.mxu0 %v252
    %394 = vmatpush.msra.mxu0 %v250
    %395 = vmatpush.msra.mxu0 %v248
    %396 = vmatpush.msra.mxu0 %v246
    %397 = vmatmul.f32.gmra.mxu0 %v242
    %v398 = vpop.f32.mrf.mxu0
    %v399 = vadd.f32 %v377, %v398
    %400 = vdwg.mxu0
    %401 = vmatpush.msra.mxu0 %v308
    %402 = vmatpush.msra.mxu0 %v306
    %403 = vmatpush.msra.mxu0 %v304
    %404 = vmatpush.msra.mxu0 %v302
    %405 = vmatpush.msra.mxu0 %v300
    %406 = vmatpush.msra.mxu0 %v298
    %407 = vmatpush.msra.mxu0 %v296
    %408 = vmatpush.msra.mxu0 %v294
    %409 = vmatpush.msra.mxu0 %v292
    %410 = vmatpush.msra.mxu0 %v290
    %411 = vmatpush.msra.mxu0 %v288
    %412 = vmatpush.msra.mxu0 %v286
    %413 = vmatpush.msra.mxu0 %v284
    %414 = vmatpush.msra.mxu0 %v282
    %415 = vmatpush.msra.mxu0 %v280
    %416 = vmatpush.msra.mxu0 %v278
    %417 = vmatmul.f32.gmra.mxu0 %v243
    %v418 = vpop.f32.mrf.mxu0
    %v419 = vadd.f32 %v399, %v418
    %420 = vdwg.mxu0
    %421 = vmatpush.msra.mxu0 %v340
    %422 = vmatpush.msra.mxu0 %v338
    %423 = vmatpush.msra.mxu0 %v336
    %424 = vmatpush.msra.mxu0 %v334
    %425 = vmatpush.msra.mxu0 %v332
    %426 = vmatpush.msra.mxu0 %v330
    %427 = vmatpush.msra.mxu0 %v328
    %428 = vmatpush.msra.mxu0 %v326
    %429 = vmatpush.msra.mxu0 %v324
    %430 = vmatpush.msra.mxu0 %v322
    %431 = vmatpush.msra.mxu0 %v320
    %432 = vmatpush.msra.mxu0 %v318
    %433 = vmatpush.msra.mxu0 %v316
    %434 = vmatpush.msra.mxu0 %v314
    %435 = vmatpush.msra.mxu0 %v312
    %436 = vmatpush.msra.mxu0 %v310
    %437 = vmatmul.f32.gmra.mxu0 %v244
    %v438 = vpop.f32.mrf.mxu0
    %v439 = vadd.f32 %v419, %v438
    %440 = vdwg.mxu0
    %441 = vmatpush.msra.mxu0 %v372
    %442 = vmatpush.msra.mxu0 %v370
    %443 = vmatpush.msra.mxu0 %v368
    %444 = vmatpush.msra.mxu0 %v366
    %445 = vmatpush.msra.mxu0 %v364
    %446 = vmatpush.msra.mxu0 %v362
    %447 = vmatpush.msra.mxu0 %v360
    %448 = vmatpush.msra.mxu0 %v358
    %449 = vmatpush.msra.mxu0 %v356
    %450 = vmatpush.msra.mxu0 %v354
    %451 = vmatpush.msra.mxu0 %v352
    %452 = vmatpush.msra.mxu0 %v350
    %453 = vmatpush.msra.mxu0 %v348
    %454 = vmatpush.msra.mxu0 %v346
    %455 = vmatpush.msra.mxu0 %v344
    %456 = vmatpush.msra.mxu0 %v342
    %457 = vmatmul.f32.gmra.mxu0 %v245
    %v458 = vpop.f32.mrf.mxu0
    %v459 = vadd.f32 %v439, %v458
    %460 = vdwg.mxu0
    %461 = vmatpush.msra.mxu0 %v277
    %462 = vmatpush.msra.mxu0 %v275
    %463 = vmatpush.msra.mxu0 %v273
    %464 = vmatpush.msra.mxu0 %v271
    %465 = vmatpush.msra.mxu0 %v269
    %466 = vmatpush.msra.mxu0 %v267
    %467 = vmatpush.msra.mxu0 %v265
    %468 = vmatpush.msra.mxu0 %v263
    %469 = vmatpush.msra.mxu0 %v261
    %470 = vmatpush.msra.mxu0 %v259
    %471 = vmatpush.msra.mxu0 %v257
    %472 = vmatpush.msra.mxu0 %v255
    %473 = vmatpush.msra.mxu0 %v253
    %474 = vmatpush.msra.mxu0 %v251
    %475 = vmatpush.msra.mxu0 %v249
    %476 = vmatpush.msra.mxu0 %v247
    %477 = vmatmul.f32.gmra.mxu0 %v242
    %v478 = vpop.f32.mrf.mxu0
    %v479 = vadd.f32 %v378, %v478
    %480 = vdwg.mxu0
    %481 = vmatpush.msra.mxu0 %v309
    %482 = vmatpush.msra.mxu0 %v307
    %483 = vmatpush.msra.mxu0 %v305
    %484 = vmatpush.msra.mxu0 %v303
    %485 = vmatpush.msra.mxu0 %v301
    %486 = vmatpush.msra.mxu0 %v299
    %487 = vmatpush.msra.mxu0 %v297
    %488 = vmatpush.msra.mxu0 %v295
    %489 = vmatpush.msra.mxu0 %v293
    %490 = vmatpush.msra.mxu0 %v291
    %491 = vmatpush.msra.mxu0 %v289
    %492 = vmatpush.msra.mxu0 %v287
    %493 = vmatpush.msra.mxu0 %v285
    %494 = vmatpush.msra.mxu0 %v283
    %495 = vmatpush.msra.mxu0 %v281
    %496 = vmatpush.msra.mxu0 %v279
    %497 = vmatmul.f32.gmra.mxu0 %v243
    %v498 = vpop.f32.mrf.mxu0
    %v499 = vadd.f32 %v479, %v498
    %500 = vdwg.mxu0
    %501 = vmatpush.msra.mxu0 %v341
    %502 = vmatpush.msra.mxu0 %v339
    %503 = vmatpush.msra.mxu0 %v337
    %504 = vmatpush.msra.mxu0 %v335
    %505 = vmatpush.msra.mxu0 %v333
    %506 = vmatpush.msra.mxu0 %v331
    %507 = vmatpush.msra.mxu0 %v329
    %508 = vmatpush.msra.mxu0 %v327
    %509 = vmatpush.msra.mxu0 %v325
    %510 = vmatpush.msra.mxu0 %v323
    %511 = vmatpush.msra.mxu0 %v321
    %512 = vmatpush.msra.mxu0 %v319
    %513 = vmatpush.msra.mxu0 %v317
    %514 = vmatpush.msra.mxu0 %v315
    %515 = vmatpush.msra.mxu0 %v313
    %516 = vmatpush.msra.mxu0 %v311
    %517 = vmatmul.f32.gmra.mxu0 %v244
    %v518 = vpop.f32.mrf.mxu0
    %v519 = vadd.f32 %v499, %v518
    %520 = vdwg.mxu0
    %521 = vmatpush.msra.mxu0 %v373
    %522 = vmatpush.msra.mxu0 %v371
    %523 = vmatpush.msra.mxu0 %v369
    %524 = vmatpush.msra.mxu0 %v367
    %525 = vmatpush.msra.mxu0 %v365
    %526 = vmatpush.msra.mxu0 %v363
    %527 = vmatpush.msra.mxu0 %v361
    %528 = vmatpush.msra.mxu0 %v359
    %529 = vmatpush.msra.mxu0 %v357
    %530 = vmatpush.msra.mxu0 %v355
    %531 = vmatpush.msra.mxu0 %v353
    %532 = vmatpush.msra.mxu0 %v351
    %533 = vmatpush.msra.mxu0 %v349
    %534 = vmatpush.msra.mxu0 %v347
    %535 = vmatpush.msra.mxu0 %v345
    %536 = vmatpush.msra.mxu0 %v343
    %537 = vmatmul.f32.gmra.mxu0 %v245
    %v538 = vpop.f32.mrf.mxu0
    %v539 = vadd.f32 %v519, %v538
    %540 = vdwg.mxu0
    %v541 = vadd.f32 %v459, %v539
    %542 = vadd.xlane.f32.xlu0 %v541
    %v543 = vpop.xlane.xlu0 %542
    %v544 = vmul.f32 %v459, %v459
    %v545 = vmul.f32 %v539, %v539
    %v546 = vadd.f32 %v544, %v545
    %547 = vadd.xlane.f32.xlu0 %v546
    %v548 = vpop.xlane.xlu0 %547
    %v549 = vmul.f32 %v543, 0.00390625
    %v550 = vmul.f32 %v548, 0.00390625
    %v551 = vmul.f32 %v549, %v549
    %v552 = vsub.f32 %v550, %v551
    %v553 = vmax.f32 %v552, 0.0
    %v554 = vadd.f32 %v553, 1e-05
    %v555 = vrsqrt.pop %v554
    %v556 = vmul.f32 %v555, %v554
    %v557 = vmul.f32 %v556, %v555
    %v558 = vmul.f32 0.5, %v557
    %v559 = vsub.f32 1.5, %v558
    %v560 = vmul.f32 %v555, %v559
    %vm561 = vweird.f32 %v554
    %vm562 = vweird.f32 %v555
    %vm563 = vmor %vm561, %vm562
    %v564 = vsel %vm563, %v555, %v560
    %v565 = vsub.f32 %v459, %v549
    %v566 = vsub.f32 %v539, %v549
    %v567 = vmul.f32 %v565, %v564
    %v568 = vmul.f32 %v566, %v564
    %s569 = scalar_lea.vmem %s6, 4
    %v570 = vld [vmem:[%s569] ss:$8 sm:$0x3]
    %v572 = vperm.slane %v570, 0
    %v573 = vperm.slane %v570, 1
    %v576 = vmul.f32 %v567, %v572
    %v577 = vmul.f32 %v568, %v573
    %s578 = scalar_lea.vmem %s6, 5
    %v579 = vld [vmem:[%s578] ss:$8 sm:$0x3]
    %v581 = vperm.slane %v579, 0
    %v582 = vperm.slane %v579, 1
    %v585 = vadd.f32 %v576, %v581
    %v586 = vadd.f32 %v577, %v582
    %vm587 = vcmp.gt.f32.partialorder %v585, 0.0
    %vm588 = vcmp.gt.f32.partialorder %v586, 0.0
    %v589 = vmin.f32 %v585, 0.0
    %v590 = vmin.f32 %v586, 0.0
    %v591 = vmul.f32 %v589, 1.442695
    %v592 = vpow.pop %v591
    %v593 = vmul.f32 %v590, 1.442695
    %v594 = vpow.pop %v593
    %v595 = vsub.f32 %v592, 1.0
    %v596 = vsub.f32 %v594, 1.0
    %v597 = vsel %vm587, %v585, %v595
    %v598 = vsel %vm588, %v586, %v596
    %v599 = vld [vmem:[%s4] sm:$0xff]
    %v600 = vld [vmem:[%s6 + $0x6] ss:$0 sm:$0xff]
    %vm601 = vcmask 64512
    %v603 = vsel %vm601, %v43, 0
    %605 = vmatpush.msra.mxu0 0.0
    %606 = vmatpush.msra.mxu0 0.0
    %607 = vmatpush.msra.mxu0 0.0
    %608 = vmatpush.msra.mxu0 0.0
    %609 = vmatpush.msra.mxu0 0.0
    %610 = vmatpush.msra.mxu0 0.0
    %611 = vmatpush.msra.mxu0 0.0
    %612 = vmatpush.msra.mxu0 0.0
    %613 = vmatpush.msra.mxu0 0.0
    %614 = vmatpush.msra.mxu0 0.0
    %615 = vmatpush.msra.mxu0 0.0
    %616 = vmatpush.msra.mxu0 0.0
    %617 = vmatpush.msra.mxu0 0.0
    %618 = vmatpush.msra.mxu0 0.0
    %619 = vmatpush.msra.mxu0 0.0
    %620 = vmatpush.msra.mxu0 %v599
    %621 = vmatmul.f32.gmra.mxu0 %v603
    %v622 = vpop.f32.mrf.mxu0
    %v623 = vadd.f32 %v600, %v622
    %624 = vdwg.mxu0
    %625 = vadd.xlane.f32.xlu0 %v623
    %v626 = vpop.xlane.xlu0 %625
    %v627 = vmul.f32 %v623, %v623
    %628 = vadd.xlane.f32.xlu0 %v627
    %v629 = vpop.xlane.xlu0 %628
    %v630 = vmul.f32 %v626, 0.0078125
    %v631 = vmul.f32 %v629, 0.0078125
    %v632 = vmul.f32 %v630, %v630
    %v633 = vsub.f32 %v631, %v632
    %v634 = vmax.f32 %v633, 0.0
    %v635 = vadd.f32 %v634, 1e-05
    %v636 = vrsqrt.pop %v635
    %v637 = vmul.f32 %v636, %v635
    %v638 = vmul.f32 %v637, %v636
    %v639 = vmul.f32 0.5, %v638
    %v640 = vsub.f32 1.5, %v639
    %v641 = vmul.f32 %v636, %v640
    %vm642 = vweird.f32 %v635
    %vm643 = vweird.f32 %v636
    %vm644 = vmor %vm642, %vm643
    %v645 = vsel %vm644, %v636, %v641
    %v646 = vsub.f32 %v623, %v630
    %v647 = vmul.f32 %v646, %v645
    %v648 = vld [vmem:[%s6 + $0x7] ss:$0 sm:$0xff]
    %v649 = vmul.f32 %v647, %v648
    %v650 = vld [vmem:[%s6 + $0x20] ss:$0 sm:$0xff]
    %v651 = vadd.f32 %v649, %v650
    %vm652 = vcmp.gt.f32.partialorder %v651, 0.0
    %v653 = vmin.f32 %v651, 0.0
    %v654 = vmul.f32 %v653, 1.442695
    %v655 = vpow.pop %v654
    %v656 = vsub.f32 %v655, 1.0
    %v657 = vsel %vm652, %v651, %v656
    %v658 = vld [vmem:[%s5] sm:$0xff]
    %v659 = vld [vmem:[%s5 + $0x8] sm:$0xff]
    %v660 = vld [vmem:[%s5 + $0x10] sm:$0xff]
    %v661 = vld [vmem:[%s5 + $0x18] sm:$0xff]
    %v662 = vld [vmem:[%s5 + $0x20] sm:$0xff]
    %v663 = vld [vmem:[%s5 + $0x28] sm:$0xff]
    %v664 = vld [vmem:[%s5 + $0x30] sm:$0xff]
    %v665 = vld [vmem:[%s5 + $0x38] sm:$0xff]
    %v666 = vld [vmem:[%s5 + $0x40] sm:$0xff]
    %v667 = vld [vmem:[%s5 + $0x48] sm:$0xff]
    %v668 = vld [vmem:[%s5 + $0x50] sm:$0xff]
    %v669 = vld [vmem:[%s5 + $0x58] sm:$0xff]
    %v670 = vld [vmem:[%s5 + $0x60] sm:$0xff]
    %v671 = vld [vmem:[%s5 + $0x68] sm:$0xff]
    %v672 = vld [vmem:[%s5 + $0x70] sm:$0xff]
    %v673 = vld [vmem:[%s5 + $0x78] sm:$0xff]
    %v674 = vld [vmem:[%s6 + $0x21] ss:$0 sm:$0xff]
    %675 = vmatpush.msra.mxu0 %v673
    %676 = vmatpush.msra.mxu0 %v672
    %677 = vmatpush.msra.mxu0 %v671
    %678 = vmatpush.msra.mxu0 %v670
    %679 = vmatpush.msra.mxu0 %v669
    %680 = vmatpush.msra.mxu0 %v668
    %681 = vmatpush.msra.mxu0 %v667
    %682 = vmatpush.msra.mxu0 %v666
    %683 = vmatpush.msra.mxu0 %v665
    %684 = vmatpush.msra.mxu0 %v664
    %685 = vmatpush.msra.mxu0 %v663
    %686 = vmatpush.msra.mxu0 %v662
    %687 = vmatpush.msra.mxu0 %v661
    %688 = vmatpush.msra.mxu0 %v660
    %689 = vmatpush.msra.mxu0 %v659
    %690 = vmatpush.msra.mxu0 %v658
    %691 = vmatmul.f32.gmra.mxu0 %v657
    %v692 = vpop.f32.mrf.mxu0
    %v693 = vadd.f32 %v674, %v692
    %694 = vdwg.mxu0
    %vm695 = vcmask 523264
    %v696 = vsel %vm695, %v693, 0.0
    %697 = vadd.xlane.f32.xlu0 %v696
    %v698 = vpop.xlane.xlu0 %697
    %v699 = vmul.f32 %v693, %v693
    %v700 = vsel %vm695, %v699, 0.0
    %701 = vadd.xlane.f32.xlu0 %v700
    %v702 = vpop.xlane.xlu0 %701
    %v703 = vmul.f32 %v698, 0.015625
    %v704 = vmul.f32 %v702, 0.015625
    %v705 = vmul.f32 %v703, %v703
    %v706 = vsub.f32 %v704, %v705
    %v707 = vmax.f32 %v706, 0.0
    %v708 = vadd.f32 %v707, 1e-05
    %v709 = vrsqrt.pop %v708
    %v710 = vmul.f32 %v709, %v708
    %v711 = vmul.f32 %v710, %v709
    %v712 = vmul.f32 0.5, %v711
    %v713 = vsub.f32 1.5, %v712
    %v714 = vmul.f32 %v709, %v713
    %vm715 = vweird.f32 %v708
    %vm716 = vweird.f32 %v709
    %vm717 = vmor %vm715, %vm716
    %v718 = vsel %vm717, %v709, %v714
    %v719 = vsub.f32 %v693, %v703
    %v720 = vmul.f32 %v719, %v718
    %v721 = vld [vmem:[%s6 + $0x22] ss:$0 sm:$0xff]
    %v722 = vmul.f32 %v720, %v721
    %v723 = vld [vmem:[%s6 + $0x23] ss:$0 sm:$0xff]
    %v724 = vadd.f32 %v722, %v723
    %vm725 = vcmp.gt.f32.partialorder %v724, 0.0
    %v726 = vmin.f32 %v724, 0.0
    %v727 = vmul.f32 %v726, 1.442695
    %v728 = vpow.pop %v727
    %v729 = vsub.f32 %v728, 1.0
    %v730 = vsel %vm725, %v724, %v729
    %s731 = scalar_lea.vmem %s6, 36
    %v732 = vld [vmem:[%s731] ss:$8 sm:$0x3]
    %v734 = vperm.slane %v732, 0
    %v735 = vperm.slane %v732, 1
    %v738 = vmul.f32 %v597, %v734
    %v739 = vmul.f32 %v598, %v735
    %v740 = vadd.f32 %v738, %v739
    %741 = vadd.xlane.f32.xlu0 %v740
    %v742 = vpop.xlane.xlu0 %741
    %v743 = vld [vmem:[%s6 + $0x25] ss:$0 sm:$0xff]
    %v744 = vmul.f32 %v730, %v743
    %v745 = vsel %vm695, %v744, 0.0
    %746 = vadd.xlane.f32.xlu0 %v745
    %v747 = vpop.xlane.xlu0 %746
    %v748 = vadd.f32 %v742, %v747
    %v749 = vld [vmem:[%s6 + $0x26] ss:$0 sm:$0xff]
    %v750 = vadd.f32 %v748, %v749
    %vm751 = vcmask 7168
    %752 = vst.msk [vmem:[%s7] sm:$0xff] %vm751, %v750
    // Predicated region
    $region34: #{critic_forward.1} parent=1 // pred_check
      _
    $region35: #{critic_forward.1} parent=1 // pred_check_branch
      %754 = sbr.rel (0) target = $region37
    $region36: #{critic_forward.1} parent=1 // pred_region
      _
    $region37: #{critic_forward.1} parent=1 // pred_fallthru
      _
    // Predicated region
    $region38: #{critic_forward.1} parent=1 // pred_check
      _
    $region39: #{critic_forward.1} parent=1 // pred_check_branch
      %756 = sbr.rel (0) target = $region41
    $region40: #{critic_forward.1} parent=1 // pred_region
      _
    $region41: #{critic_forward.1} parent=1 // pred_fallthru
      _
    %757 = vsyncpa [#allocation3], 1

</llo_original>
